<compile_context>
chip_gen: v7x
topology: tpu7x:2x2x1
jax: 0.10.0
libtpu: 0.0.40
codegen_flags: <defaults>
</compile_context>

<pallas_src>
import jax
import jax.numpy as jnp
from jax.experimental import pallas as pl
from jax.experimental.pallas import tpu as pltpu


def _pose_enc_add_kernel(x_ref, emb_ref, o_ref):
    # x_ref:   (TB, TL) lane-dense tile of the flattened input
    # emb_ref: (1, TL)  renormed / frame-reversed / N-tiled embedding row
    # Native-dtype add (HBM-bound; VALU has huge slack either way).
    o_ref[...] = x_ref[...] + emb_ref[...]


def _tpu_chip_info():
    """Return (generation, num_tensorcores_per_chip); conservative on unknown."""
    try:
        kind = jax.devices()[0].device_kind.lower()
    except Exception:  # pragma: no cover - CPU/interpret fallback
        return 0, 1
    if "v7" in kind:
        return 7, 2
    if "v6" in kind:
        return 6, 1
    if "v5" in kind:
        return 5, 1
    return 0, 1


def _choose_tiles(B, L, itemsize, target_bytes, num_tc):
    """Pick (TB, TL) for a (B, L) stream with tiles ~target_bytes.

    Legality (TPU (8,128) rule): TL % 128 == 0 or TL == L; TB % 8 == 0 or TB == B.
    The grid uses pl.cdiv, so the last block along either axis may be ragged —
    OOB reads feed discarded writes (pure elementwise), which is safe.
    """
    target_elems = max(1024, target_bytes // max(itemsize, 1))

    # Sublane (batch) block.
    if B <= 8:
        tb = B                                       # == full dim -> always legal
    else:
        rows = max(1, target_elems // L)
        if num_tc > 1:
            # Only multi-TC chips benefit from forcing multiple grid steps.
            rows = min(rows, max(1, pl.cdiv(B, 2 * num_tc)))
        tb = max(8, (rows // 8) * 8)                 # multiple of 8
        tb = min(tb, (B // 8) * 8)

    # Lane (feature) block.
    lane_budget = max(128, target_elems // tb)
    if L <= lane_budget:
        tl = L                                       # == full dim -> always legal
    else:
        tl = min((lane_budget // 128) * 128, L)
        tl = max(tl, min(L, 128))
    return tb, tl


def learned_pose2d_encoding(x, emb_table, in_F, *, alias_x_to_out=False,
                            target_tile_bytes=None, min_pallas_bytes=2 << 20):
    """x: (B, in_F, N, D); emb_table: (max_obs_len, D)."""
    B, F, N, D = x.shape
    assert F == in_F
    L = F * N * D
    itemsize = x.dtype.itemsize

    # --- wrapper glue (O(F*D), fused by XLA; off the per-step critical path) ---
    # arange(in_F-1, -1, -1) lookup == flip of the first in_F rows (no gather HLO).
    emb = jnp.flip(emb_table[:in_F].astype(jnp.float32), axis=0)            # (F, D)
    # nn.Embedding(max_norm=True): rows with L2 norm > 1 rescaled (torch eps 1e-7).
    norm = jnp.sqrt(jnp.sum(emb * emb, axis=-1, keepdims=True))             # (F, 1)
    scale = jnp.where(norm > 1.0, 1.0 / (norm + 1e-7), 1.0)
    emb_scaled = (emb * scale).astype(x.dtype)                              # (F, D)

    total_bytes = x.size * itemsize
    if total_bytes < min_pallas_bytes:
        # Launch + pipeline prologue/epilogue costs more than moving the whole
        # tensor at this size; let XLA fuse the broadcast add.
        return x + emb_scaled[None, :, None, :]

    # Pre-tile over N and flatten so the kernel sees a single lane-dense row.
    emb_row = jnp.broadcast_to(emb_scaled[:, None, :], (F, N, D)).reshape(1, L)

    # Lane-dense 2-D view of x (any F works; batch is the sublane axis).
    x2 = x.reshape(B, L)

    gen, num_tc = _tpu_chip_info()
    if target_tile_bytes is None:
        # v7x: 4 MiB (64 MiB physical VMEM, 4x tile double-buffered footprint);
        # v6e: 6 MiB; v5e: 4 MiB (safe with explicit vmem_limit_bytes below).
        target_tile_bytes = {7: 4 << 20, 6: 6 << 20, 5: 4 << 20}.get(gen, 4 << 20)

    TB, TL = _choose_tiles(B, L, itemsize, target_tile_bytes, num_tc)
    grid = (pl.cdiv(B, TB), pl.cdiv(L, TL))

    tile_bytes = TB * TL * itemsize
    emb_tile_bytes = TL * emb_row.dtype.itemsize
    vmem_limit = int(min(max(4 * tile_bytes + 4 * emb_tile_bytes + (4 << 20),
                             8 << 20), 48 << 20))

    cost = pl.CostEstimate(
        flops=B * L,
        transcendentals=0,
        bytes_accessed=2 * total_bytes + L * emb_row.dtype.itemsize)

    extra = {}
    if alias_x_to_out:
        # Only if the caller donates x; avoids a second full-size HBM buffer.
        extra["input_output_aliases"] = {0: 0}

    out2 = pl.pallas_call(
        _pose_enc_add_kernel,
        out_shape=jax.ShapeDtypeStruct((B, L), x.dtype),
        grid_spec=pltpu.PrefetchScalarGridSpec(
            num_scalar_prefetch=0,
            grid=grid,
            in_specs=[
                pl.BlockSpec((TB, TL), lambda b, l: (b, l)),
                pl.BlockSpec((1, TL), lambda b, l: (0, l)),
            ],
            out_specs=pl.BlockSpec((TB, TL), lambda b, l: (b, l)),
        ),
        compiler_params=pltpu.CompilerParams(
            dimension_semantics=("parallel", "parallel"),
            vmem_limit_bytes=vmem_limit),
        cost_estimate=cost,
        **extra,
    )(x2, emb_row)

    return out2.reshape(B, F, N, D)


def _reference(x, emb_table, in_F):
    # Matches torch semantics (max_norm renorm with eps 1e-7) for tolerance checking.
    idx = jnp.arange(in_F - 1, -1, -1)
    emb = emb_table[idx]
    norm = jnp.sqrt(jnp.sum(emb * emb, axis=-1, keepdims=True))
    emb = emb * jnp.where(norm > 1.0, 1.0 / (norm + 1e-7), 1.0)
    return x + emb[None, :, None, :]


if __name__ == "__main__":
    key = jax.random.PRNGKey(0)
    k_x, k_emb, k_x2 = jax.random.split(key, 3)

    # Small shapes: batch=2, in_F=8 frames, N=4 agents, d_model=128,
    # embedding table truncated to 64 positions (module default is 8000).
    B, in_F, N, D = 2, 8, 4, 128
    max_obs_len = 64

    x = jax.random.normal(k_x, (B, in_F, N, D), dtype=jnp.float32)
    emb_table = jax.random.normal(k_emb, (max_obs_len, D), dtype=jnp.float32)
    ref = _reference(x, emb_table, in_F)

    # 1) Pallas kernel path (forced even at demo size).
    out = learned_pose2d_encoding(x, emb_table, in_F, min_pallas_bytes=0)
    out = jax.block_until_ready(out)
    assert out.shape == (B, in_F, N, D)
    assert jnp.allclose(out, ref, atol=1e-5, rtol=1e-5)

    # 2) Ragged-grid / lane-chunked path: TB (8) does not divide B (10) and the
    #    row is split into 128-multiple lane chunks (exercises the cdiv grid).
    B2 = 10
    x_big = jax.random.normal(k_x2, (B2, in_F, N, D), dtype=jnp.float32)
    out2 = learned_pose2d_encoding(x_big, emb_table, in_F,
                                   min_pallas_bytes=0, target_tile_bytes=32 * 1024)
    out2 = jax.block_until_ready(out2)
    assert jnp.allclose(out2, _reference(x_big, emb_table, in_F),
                        atol=1e-5, rtol=1e-5)

    # 3) Tiny-input fallback path (pure fused XLA add, default thresholds).
    out3 = jax.block_until_ready(learned_pose2d_encoding(x, emb_table, in_F))
    assert jnp.allclose(out3, ref, atol=1e-5, rtol=1e-5)

    print("KERNEL_OK")
</pallas_src>

<mosaic_0001>
module attributes {stable_mosaic.version = 11 : i64} {
  func.func @_pose_enc_add_kernel(%arg0: i32, %arg1: i32, %arg2: memref<2x4096xf32, #tpu.memory_space<vmem>>, %arg3: memref<1x4096xf32, #tpu.memory_space<vmem>>, %arg4: memref<2x4096xf32, #tpu.memory_space<vmem>>) attributes {dimension_semantics = [#tpu.dimension_semantics<parallel>, #tpu.dimension_semantics<parallel>], iteration_bounds = array<i64: 1, 1>, scalar_prefetch = 0 : i64, scratch_operands = 0 : i64, tpu.core_type = #tpu.core_type<tc>, window_params = [{transform_indices = @transform_0, window_bounds = array<i64: 2, 4096>}, {transform_indices = @transform_1, window_bounds = array<i64: 1, 4096>}, {transform_indices = @transform_2, window_bounds = array<i64: 2, 4096>}]} {
    %c0 = arith.constant 0 : index
    %c0_0 = arith.constant 0 : index
    %0 = vector.load %arg2[%c0, %c0_0] : memref<2x4096xf32, #tpu.memory_space<vmem>>, vector<2x4096xf32>
    %c0_1 = arith.constant 0 : index
    %c0_2 = arith.constant 0 : index
    %1 = vector.load %arg3[%c0_1, %c0_2] : memref<1x4096xf32, #tpu.memory_space<vmem>>, vector<1x4096xf32>
    %2 = vector.broadcast %1 : vector<1x4096xf32> to vector<2x4096xf32>
    %3 = arith.addf %0, %2 : vector<2x4096xf32>
    %c0_3 = arith.constant 0 : index
    %c0_4 = arith.constant 0 : index
    %4 = vector.load %arg4[%c0_3, %c0_4] : memref<2x4096xf32, #tpu.memory_space<vmem>>, vector<2x4096xf32>
    tpu.vector_store %arg4[%c0_3, %c0_4], %3 {strides = array<i32>} : memref<2x4096xf32, #tpu.memory_space<vmem>>, vector<2x4096xf32>,
    return
  }
  func.func @transform_0(%arg0: i32, %arg1: i32) -> (i32, i32) {
    %c0_i32 = arith.constant 0 : i32
    return %arg0, %arg1 : i32, i32
  }
  func.func @transform_1(%arg0: i32, %arg1: i32) -> (i32, i32) {
    %c0_i32 = arith.constant 0 : i32
    %c0_i32_0 = arith.constant 0 : i32
    return %c0_i32, %arg1 : i32, i32
  }
  func.func @transform_2(%arg0: i32, %arg1: i32) -> (i32, i32) {
    %c0_i32 = arith.constant 0 : i32
    return %arg0, %arg1 : i32, i32
  }
}

</mosaic_0001>

<llo_original>
// kernel: tpu_custom_call.1
$region0: #{tpu_custom_call.1}
  #allocation0 [shape = 'u32[]', space=smem, size = 0x4, offset = 0x4, fixed_abs, tag = 'smem constant byte address 0x4 - core index']
  #allocation1 [shape = 'u32[144,128]{1,0:T(1,128)}', space=vmem, size = 0x12000, scoped, tag = 'internal scratch']
  %s0 = inlined_call_operand.hbm [shape: f32[2,4096], index: 0, kind: input, shape index: {}]
  %s1 = inlined_call_operand.hbm [shape: f32[1,4096], index: 1, kind: input, shape index: {}]
  %s2 = inlined_call_operand.hbm [shape: f32[2,4096], index: 2, kind: output, shape index: {}]
  %s3 = sld [smem:[#allocation0]]
  $region26: #{tpu_custom_call.1} parent=0
    _
  %s5 = ssub.s32 1, %s3
  %s6 = scalar_select 0, %s5, %s3
  $region1: #{tpu_custom_call.1} parent=0
    #allocation2 [shape = 'u8[32768]{0}', space=vmem, size = 0x8000, scoped, tag = 'input window, operand 0, single buffered']
    #allocation3 [shape = 's32[1]{0}', space=sflag, size = 0x4, scoped, tag = 'scoped memory for tpu_custom_call.1']
    #allocation4 [shape = 's32[1]{0}', space=sflag, size = 0x4, scoped, tag = 'scoped memory for tpu_custom_call.1']
    #allocation5 [shape = 'u8[16384]{0}', space=vmem, size = 0x4000, scoped, tag = 'input window, operand 1, single buffered']
    #allocation6 [shape = 's32[1]{0}', space=sflag, size = 0x4, scoped, tag = 'scoped memory for tpu_custom_call.1']
    #allocation7 [shape = 'u8[32768]{0}', space=vmem, size = 0x8000, scoped, tag = 'output window, operand 0, single buffered']
    %7 = vsyncpa [#allocation3], 0
    %8 = vsyncpa [#allocation6], 0
    %9 = vsyncpa [#allocation4], 0
    // Predicated region
    $region2: #{tpu_custom_call.1} parent=1 // pred_check
      _
    $region3: #{tpu_custom_call.1} parent=1 // pred_check_branch
      %11 = sbr.rel (0) target = $region5
    $region4: #{tpu_custom_call.1} parent=1 // pred_region
      %s13 = ssub.s32 1024, 1024
      %14 = vsyncadd [#allocation3], %s13
      %s16 = sshll.u32 [#allocation2], 4
      %s17 = int_to_ptr.vmem [resolvable:$true] %s16
      %19 = dma.hbm_to_vmem [thread:$0]  %s0, 1024, %s17, [#allocation3]
    $region5: #{tpu_custom_call.1} parent=1 // pred_fallthru
      _
    // Predicated region
    $region6: #{tpu_custom_call.1} parent=1 // pred_check
      _
    $region7: #{tpu_custom_call.1} parent=1 // pred_check_branch
      %21 = sbr.rel (0) target = $region9
    $region8: #{tpu_custom_call.1} parent=1 // pred_region
      %s23 = ssub.s32 512, 512
      %24 = vsyncadd [#allocation6], %s23
      %s26 = sshll.u32 [#allocation5], 4
      %s27 = int_to_ptr.vmem [resolvable:$true] %s26
      %29 = dma.hbm_to_vmem [thread:$0]  %s1, 512, %s27, [#allocation6]
    $region9: #{tpu_custom_call.1} parent=1 // pred_fallthru
      _
    // Predicated region
    $region10: #{tpu_custom_call.1} parent=1 // pred_check
      _
    $region11: #{tpu_custom_call.1} parent=1 // pred_check_branch
      %31 = sbr.rel (0) target = $region13
    $region12: #{tpu_custom_call.1} parent=1 // pred_region
      %32 = dma.done [#allocation3], 1024
    $region13: #{tpu_custom_call.1} parent=1 // pred_fallthru
      _
    // Predicated region
    $region14: #{tpu_custom_call.1} parent=1 // pred_check
      _
    $region15: #{tpu_custom_call.1} parent=1 // pred_check_branch
      %34 = sbr.rel (0) target = $region17
    $region16: #{tpu_custom_call.1} parent=1 // pred_region
      %35 = dma.done [#allocation6], 512
    $region17: #{tpu_custom_call.1} parent=1 // pred_fallthru
      _
    %v36 = vld [vmem:[#allocation2] sm:$0xff]
    %v37 = vld [vmem:[#allocation2 + $0x8] sm:$0xff]
    %v38 = vld [vmem:[#allocation2 + $0x10] sm:$0xff]
    %v39 = vld [vmem:[#allocation2 + $0x18] sm:$0xff]
    %v40 = vld [vmem:[#allocation2 + $0x20] sm:$0xff]
    %v41 = vld [vmem:[#allocation2 + $0x28] sm:$0xff]
    %v42 = vld [vmem:[#allocation2 + $0x30] sm:$0xff]
    %v43 = vld [vmem:[#allocation2 + $0x38] sm:$0xff]
    %v44 = vld [vmem:[#allocation5] sm:$0xff]
    %v45 = vld [vmem:[#allocation5 + $0x8] sm:$0xff]
    %v46 = vld [vmem:[#allocation5 + $0x10] sm:$0xff]
    %v47 = vld [vmem:[#allocation5 + $0x18] sm:$0xff]
    %v52 = vlaneseq
    %v53 = vshrl.u32 %v52, 7
    %v54 = vsub.s32 0, %v53
    %v55 = vrot.slane %v44, %v54
    %v56 = vlaneseq
    %v57 = vshrl.u32 %v56, 7
    %v58 = vsub.s32 1, %v57
    %v59 = vrot.slane %v44, %v58
    %v60 = vlaneseq
    %v61 = vshrl.u32 %v60, 7
    %v62 = vsub.s32 2, %v61
    %v63 = vrot.slane %v44, %v62
    %v64 = vlaneseq
    %v65 = vshrl.u32 %v64, 7
    %v66 = vsub.s32 3, %v65
    %v67 = vrot.slane %v44, %v66
    %v68 = vlaneseq
    %v69 = vshrl.u32 %v68, 7
    %v70 = vsub.s32 4, %v69
    %v71 = vrot.slane %v44, %v70
    %v72 = vlaneseq
    %v73 = vshrl.u32 %v72, 7
    %v74 = vsub.s32 5, %v73
    %v75 = vrot.slane %v44, %v74
    %v76 = vlaneseq
    %v77 = vshrl.u32 %v76, 7
    %v78 = vsub.s32 6, %v77
    %v79 = vrot.slane %v44, %v78
    %v80 = vlaneseq
    %v81 = vshrl.u32 %v80, 7
    %v82 = vsub.s32 7, %v81
    %v83 = vrot.slane %v44, %v82
    %v84 = vlaneseq
    %v85 = vshrl.u32 %v84, 7
    %v86 = vsub.s32 0, %v85
    %v87 = vrot.slane %v45, %v86
    %v88 = vlaneseq
    %v89 = vshrl.u32 %v88, 7
    %v90 = vsub.s32 1, %v89
    %v91 = vrot.slane %v45, %v90
    %v92 = vlaneseq
    %v93 = vshrl.u32 %v92, 7
    %v94 = vsub.s32 2, %v93
    %v95 = vrot.slane %v45, %v94
    %v96 = vlaneseq
    %v97 = vshrl.u32 %v96, 7
    %v98 = vsub.s32 3, %v97
    %v99 = vrot.slane %v45, %v98
    %v100 = vlaneseq
    %v101 = vshrl.u32 %v100, 7
    %v102 = vsub.s32 4, %v101
    %v103 = vrot.slane %v45, %v102
    %v104 = vlaneseq
    %v105 = vshrl.u32 %v104, 7
    %v106 = vsub.s32 5, %v105
    %v107 = vrot.slane %v45, %v106
    %v108 = vlaneseq
    %v109 = vshrl.u32 %v108, 7
    %v110 = vsub.s32 6, %v109
    %v111 = vrot.slane %v45, %v110
    %v112 = vlaneseq
    %v113 = vshrl.u32 %v112, 7
    %v114 = vsub.s32 7, %v113
    %v115 = vrot.slane %v45, %v114
    %v116 = vlaneseq
    %v117 = vshrl.u32 %v116, 7
    %v118 = vsub.s32 0, %v117
    %v119 = vrot.slane %v46, %v118
    %v120 = vlaneseq
    %v121 = vshrl.u32 %v120, 7
    %v122 = vsub.s32 1, %v121
    %v123 = vrot.slane %v46, %v122
    %v124 = vlaneseq
    %v125 = vshrl.u32 %v124, 7
    %v126 = vsub.s32 2, %v125
    %v127 = vrot.slane %v46, %v126
    %v128 = vlaneseq
    %v129 = vshrl.u32 %v128, 7
    %v130 = vsub.s32 3, %v129
    %v131 = vrot.slane %v46, %v130
    %v132 = vlaneseq
    %v133 = vshrl.u32 %v132, 7
    %v134 = vsub.s32 4, %v133
    %v135 = vrot.slane %v46, %v134
    %v136 = vlaneseq
    %v137 = vshrl.u32 %v136, 7
    %v138 = vsub.s32 5, %v137
    %v139 = vrot.slane %v46, %v138
    %v140 = vlaneseq
    %v141 = vshrl.u32 %v140, 7
    %v142 = vsub.s32 6, %v141
    %v143 = vrot.slane %v46, %v142
    %v144 = vlaneseq
    %v145 = vshrl.u32 %v144, 7
    %v146 = vsub.s32 7, %v145
    %v147 = vrot.slane %v46, %v146
    %v148 = vlaneseq
    %v149 = vshrl.u32 %v148, 7
    %v150 = vsub.s32 0, %v149
    %v151 = vrot.slane %v47, %v150
    %v152 = vlaneseq
    %v153 = vshrl.u32 %v152, 7
    %v154 = vsub.s32 1, %v153
    %v155 = vrot.slane %v47, %v154
    %v156 = vlaneseq
    %v157 = vshrl.u32 %v156, 7
    %v158 = vsub.s32 2, %v157
    %v159 = vrot.slane %v47, %v158
    %v160 = vlaneseq
    %v161 = vshrl.u32 %v160, 7
    %v162 = vsub.s32 3, %v161
    %v163 = vrot.slane %v47, %v162
    %v164 = vlaneseq
    %v165 = vshrl.u32 %v164, 7
    %v166 = vsub.s32 4, %v165
    %v167 = vrot.slane %v47, %v166
    %v168 = vlaneseq
    %v169 = vshrl.u32 %v168, 7
    %v170 = vsub.s32 5, %v169
    %v171 = vrot.slane %v47, %v170
    %v172 = vlaneseq
    %v173 = vshrl.u32 %v172, 7
    %v174 = vsub.s32 6, %v173
    %v175 = vrot.slane %v47, %v174
    %v176 = vlaneseq
    %v177 = vshrl.u32 %v176, 7
    %v178 = vsub.s32 7, %v177
    %v179 = vrot.slane %v47, %v178
    %v180 = vcombine.low %v55, %v59
    %v181 = vcombine.low %v63, %v67
    %v183 = vunpack.c.l.s4 1983009808
    %v184 = vunpack.c.0.s8 %v183
    %v185 = vlaneseq
    %v186 = vshrl.u32 %v185, 7
    %v187 = vsub.s32 %v184, %v186
    %v188 = vrot.slane %v180, %v187
    %v190 = vunpack.c.l.s4 1983009808
    %v191 = vunpack.c.0.s8 %v190
    %v192 = vlaneseq
    %v193 = vshrl.u32 %v192, 7
    %v194 = vsub.s32 %v191, %v193
    %v195 = vrot.slane %v181, %v194
    %v196 = vcombine.low %v188, %v195
    %v197 = vcombine.low %v71, %v75
    %v198 = vcombine.low %v79, %v83
    %v200 = vunpack.c.l.s4 1983009808
    %v201 = vunpack.c.0.s8 %v200
    %v202 = vlaneseq
    %v203 = vshrl.u32 %v202, 7
    %v204 = vsub.s32 %v201, %v203
    %v205 = vrot.slane %v197, %v204
    %v207 = vunpack.c.l.s4 1983009808
    %v208 = vunpack.c.0.s8 %v207
    %v209 = vlaneseq
    %v210 = vshrl.u32 %v209, 7
    %v211 = vsub.s32 %v208, %v210
    %v212 = vrot.slane %v198, %v211
    %v213 = vcombine.low %v205, %v212
    %v214 = vcombine.low %v87, %v91
    %v215 = vcombine.low %v95, %v99
    %v217 = vunpack.c.l.s4 1983009808
    %v218 = vunpack.c.0.s8 %v217
    %v219 = vlaneseq
    %v220 = vshrl.u32 %v219, 7
    %v221 = vsub.s32 %v218, %v220
    %v222 = vrot.slane %v214, %v221
    %v224 = vunpack.c.l.s4 1983009808
    %v225 = vunpack.c.0.s8 %v224
    %v226 = vlaneseq
    %v227 = vshrl.u32 %v226, 7
    %v228 = vsub.s32 %v225, %v227
    %v229 = vrot.slane %v215, %v228
    %v230 = vcombine.low %v222, %v229
    %v231 = vcombine.low %v103, %v107
    %v232 = vcombine.low %v111, %v115
    %v234 = vunpack.c.l.s4 1983009808
    %v235 = vunpack.c.0.s8 %v234
    %v236 = vlaneseq
    %v237 = vshrl.u32 %v236, 7
    %v238 = vsub.s32 %v235, %v237
    %v239 = vrot.slane %v231, %v238
    %v241 = vunpack.c.l.s4 1983009808
    %v242 = vunpack.c.0.s8 %v241
    %v243 = vlaneseq
    %v244 = vshrl.u32 %v243, 7
    %v245 = vsub.s32 %v242, %v244
    %v246 = vrot.slane %v232, %v245
    %v247 = vcombine.low %v239, %v246
    %v248 = vcombine.low %v119, %v123
    %v249 = vcombine.low %v127, %v131
    %v251 = vunpack.c.l.s4 1983009808
    %v252 = vunpack.c.0.s8 %v251
    %v253 = vlaneseq
    %v254 = vshrl.u32 %v253, 7
    %v255 = vsub.s32 %v252, %v254
    %v256 = vrot.slane %v248, %v255
    %v258 = vunpack.c.l.s4 1983009808
    %v259 = vunpack.c.0.s8 %v258
    %v260 = vlaneseq
    %v261 = vshrl.u32 %v260, 7
    %v262 = vsub.s32 %v259, %v261
    %v263 = vrot.slane %v249, %v262
    %v264 = vcombine.low %v256, %v263
    %v265 = vcombine.low %v135, %v139
    %v266 = vcombine.low %v143, %v147
    %v268 = vunpack.c.l.s4 1983009808
    %v269 = vunpack.c.0.s8 %v268
    %v270 = vlaneseq
    %v271 = vshrl.u32 %v270, 7
    %v272 = vsub.s32 %v269, %v271
    %v273 = vrot.slane %v265, %v272
    %v275 = vunpack.c.l.s4 1983009808
    %v276 = vunpack.c.0.s8 %v275
    %v277 = vlaneseq
    %v278 = vshrl.u32 %v277, 7
    %v279 = vsub.s32 %v276, %v278
    %v280 = vrot.slane %v266, %v279
    %v281 = vcombine.low %v273, %v280
    %v282 = vcombine.low %v151, %v155
    %v283 = vcombine.low %v159, %v163
    %v285 = vunpack.c.l.s4 1983009808
    %v286 = vunpack.c.0.s8 %v285
    %v287 = vlaneseq
    %v288 = vshrl.u32 %v287, 7
    %v289 = vsub.s32 %v286, %v288
    %v290 = vrot.slane %v282, %v289
    %v292 = vunpack.c.l.s4 1983009808
    %v293 = vunpack.c.0.s8 %v292
    %v294 = vlaneseq
    %v295 = vshrl.u32 %v294, 7
    %v296 = vsub.s32 %v293, %v295
    %v297 = vrot.slane %v283, %v296
    %v298 = vcombine.low %v290, %v297
    %v299 = vcombine.low %v167, %v171
    %v300 = vcombine.low %v175, %v179
    %v302 = vunpack.c.l.s4 1983009808
    %v303 = vunpack.c.0.s8 %v302
    %v304 = vlaneseq
    %v305 = vshrl.u32 %v304, 7
    %v306 = vsub.s32 %v303, %v305
    %v307 = vrot.slane %v299, %v306
    %v309 = vunpack.c.l.s4 1983009808
    %v310 = vunpack.c.0.s8 %v309
    %v311 = vlaneseq
    %v312 = vshrl.u32 %v311, 7
    %v313 = vsub.s32 %v310, %v312
    %v314 = vrot.slane %v300, %v313
    %v315 = vcombine.low %v307, %v314
    %v324 = vadd.f32 %v36, %v196
    %v325 = vadd.f32 %v37, %v213
    %v326 = vadd.f32 %v38, %v230
    %v327 = vadd.f32 %v39, %v247
    %v328 = vadd.f32 %v40, %v264
    %v329 = vadd.f32 %v41, %v281
    %v330 = vadd.f32 %v42, %v298
    %v331 = vadd.f32 %v43, %v315
    %332 = vst [vmem:[#allocation7] sm:$0xff] %v324
    %333 = vst [vmem:[#allocation7 + $0x8] sm:$0xff] %v325
    %334 = vst [vmem:[#allocation7 + $0x10] sm:$0xff] %v326
    %335 = vst [vmem:[#allocation7 + $0x18] sm:$0xff] %v327
    %336 = vst [vmem:[#allocation7 + $0x20] sm:$0xff] %v328
    %337 = vst [vmem:[#allocation7 + $0x28] sm:$0xff] %v329
    %338 = vst [vmem:[#allocation7 + $0x30] sm:$0xff] %v330
    %339 = vst [vmem:[#allocation7 + $0x38] sm:$0xff] %v331
    // Predicated region
    $region18: #{tpu_custom_call.1} parent=1 // pred_check
      _
    $region19: #{tpu_custom_call.1} parent=1 // pred_check_branch
      %341 = sbr.rel (0) target = $region21
    $region20: #{tpu_custom_call.1} parent=1 // pred_region
      %s343 = ssub.s32 1024, 1024
      %344 = vsyncadd [#allocation4], %s343
      %s346 = sshll.u32 [#allocation7], 4
      %s347 = int_to_ptr.vmem [resolvable:$true] %s346
      %349 = dma.vmem_to_hbm [thread:$0]  %s347, 1024, %s2, [#allocation4]
    $region21: #{tpu_custom_call.1} parent=1 // pred_fallthru
      _
    // Predicated region
    $region22: #{tpu_custom_call.1} parent=1 // pred_check
      _
    $region23: #{tpu_custom_call.1} parent=1 // pred_check_branch
      %351 = sbr.rel (0) target = $region25
    $region24: #{tpu_custom_call.1} parent=1 // pred_region
      %352 = dma.done [#allocation4], 1024
    $region25: #{tpu_custom_call.1} parent=1 // pred_fallthru
      _
    %353 = vsyncpa [#allocation3], 1
    %354 = vsyncpa [#allocation6], 1
    %355 = vsyncpa [#allocation4], 1

</llo_original>
